<compile_context>
chip_gen: v6e
topology: v6e:2x2x1
jax: 0.10.0
libtpu: 0.0.40
codegen_flags: <defaults>
</compile_context>

<pallas_src>
import jax
import jax.numpy as jnp
from jax.experimental import pallas as pl
from jax.experimental.pallas import tpu as pltpu

NEG_SLOPE = 0.01  # torch.nn.LeakyReLU default


def _round_up(n, m):
    return ((n + m - 1) // m) * m


def fc_kernel(x_ref, w1_ref, b1_ref, w2_ref, b2_ref, o_ref):
    # Layer 1: Linear(784 -> 100, padded to 128 lanes) + LeakyReLU
    # (Dropout = identity, eval mode). bf16 x bf16 -> f32 accumulation on MXU.
    xb = x_ref[...].astype(jnp.bfloat16)        # in-kernel cast, hides under DMA
    h = jnp.dot(xb, w1_ref[...], preferred_element_type=jnp.float32)
    h = h + b1_ref[...]
    h = jnp.where(h >= 0, h, NEG_SLOPE * h)

    # Layer 2: Linear(100 -> 10) + LeakyReLU (Dropout = identity, eval mode).
    y = jnp.dot(h.astype(jnp.bfloat16), w2_ref[...],
                preferred_element_type=jnp.float32)
    y = y + b2_ref[...]
    y = jnp.where(y >= 0, y, NEG_SLOPE * y)

    o_ref[...] = y.astype(o_ref.dtype)


def prepare_fc_params(w1, b1, w2, b2):
    """One-time weight prep (hoisted out of the per-call path).

    Weights are stored [in, out] (transposed from PyTorch's [out, in]).
    Only the hidden dim is padded (100 -> 128) so hidden activations are
    lane-dense; the 784 input dim and 10 output dim stay at their true sizes.
    Weights are cast to bf16 (f32 accumulation in-kernel); biases stay f32.
    Zero padding is exact: leaky_relu(0) == 0, padded lanes contribute nothing.
    """
    D_in, H = w1.shape
    D_out = w2.shape[1]
    H_p = _round_up(H, 128)   # 100 -> 128
    w1_p = jnp.zeros((D_in, H_p), jnp.bfloat16).at[:, :H].set(
        w1.astype(jnp.bfloat16))
    b1_p = jnp.zeros((1, H_p), jnp.float32).at[:, :H].set(
        jnp.reshape(b1, (1, H)).astype(jnp.float32))
    w2_p = jnp.zeros((H_p, D_out), jnp.bfloat16).at[:H, :].set(
        w2.astype(jnp.bfloat16))
    b2_p = jnp.reshape(b2, (1, D_out)).astype(jnp.float32)
    return w1_p, b1_p, w2_p, b2_p


def _choose_tile(batch, tile_b):
    """Batch tile: multiple of 16 (bf16 sublane packing); >= 2 grid steps for
    large batches so the "parallel" axis can shard across v7x's 2 TensorCores;
    padding waste bounded by one 16-row group per step (never a full tile)."""
    if batch <= 16:
        return _round_up(batch, 8)
    tile_b = max(_round_up(tile_b, 16), 16)
    n_steps = pl.cdiv(batch, tile_b)
    if batch >= 128:
        n_steps = max(n_steps, 2)
    return _round_up(pl.cdiv(batch, n_steps), 16)


def fc_forward(x, w1_p, b1_p, w2_p, b2_p, *, tile_b=2048):
    """x: [B, 784] f32, passed unpadded/uncast; params from prepare_fc_params."""
    B, D_in = x.shape
    H_p = w1_p.shape[1]
    D_out = w2_p.shape[1]

    tile = _choose_tile(B, tile_b)
    grid = (pl.cdiv(B, tile),)

    # Memory-bound kernel: advisory cost so XLA schedules neighbors around it.
    cost = pl.CostEstimate(
        flops=int(2 * B * (D_in * H_p + H_p * D_out)),
        transcendentals=0,
        bytes_accessed=int(B * D_in * 4 + w1_p.size * 2 + w2_p.size * 2
                           + b1_p.size * 4 + b2_p.size * 4 + B * D_out * 4),
    )

    return pl.pallas_call(
        fc_kernel,
        out_shape=jax.ShapeDtypeStruct((B, D_out), jnp.float32),
        grid_spec=pltpu.PrefetchScalarGridSpec(
            num_scalar_prefetch=0,
            grid=grid,
            in_specs=[
                # x: batch-tiled; full (true) feature axis -> no padded HBM copy.
                pl.BlockSpec((tile, D_in), lambda i: (i, 0)),
                # Weights / biases: constant block index -> fetched once and
                # resident in VMEM across the batch loop.
                pl.BlockSpec((D_in, H_p), lambda i: (0, 0)),
                pl.BlockSpec((1, H_p), lambda i: (0, 0)),
                pl.BlockSpec((H_p, D_out), lambda i: (0, 0)),
                pl.BlockSpec((1, D_out), lambda i: (0, 0)),
            ],
            # Output at its true (B, 10) shape: only 40 B/row of HBM writes and
            # no trailing slice pass; masked vst is cheap (kernel is HBM-bound).
            out_specs=pl.BlockSpec((tile, D_out), lambda i: (i, 0)),
        ),
        compiler_params=pltpu.CompilerParams(
            dimension_semantics=("parallel",),
            # Covers double-buffered f32 x tiles at tile=2048 (v5e scoped
            # default is only 16 MiB) while staying under v7x's 64 MiB physical.
            vmem_limit_bytes=48 * 1024 * 1024,
        ),
        cost_estimate=cost,
    )(x, w1_p, b1_p, w2_p, b2_p)


def _torch_linear_init(key, fan_in, fan_out):
    """Deterministic init mimicking torch.nn.Linear: U(-1/sqrt(fan_in), 1/sqrt(fan_in))."""
    kw, kb = jax.random.split(key)
    bound = 1.0 / (fan_in ** 0.5)
    w = jax.random.uniform(kw, (fan_in, fan_out), jnp.float32, -bound, bound)
    b = jax.random.uniform(kb, (1, fan_out), jnp.float32, -bound, bound)
    return w, b


def reference_forward(x, w1, b1, w2, b2):
    # Match the kernel's bf16-input / f32-accumulate numerics.
    xb = x.astype(jnp.bfloat16).astype(jnp.float32)
    w1b = w1.astype(jnp.bfloat16).astype(jnp.float32)
    w2b = w2.astype(jnp.bfloat16).astype(jnp.float32)
    h = xb @ w1b + b1.reshape(1, -1)
    h = jnp.where(h >= 0, h, NEG_SLOPE * h)
    h = h.astype(jnp.bfloat16).astype(jnp.float32)
    y = h @ w2b + b2.reshape(1, -1)
    return jnp.where(y >= 0, y, NEG_SLOPE * y)


if __name__ == "__main__":
    key = jax.random.PRNGKey(0)
    k_x, k_x2, k_l1, k_l2 = jax.random.split(key, 4)

    D_IN, H, D_OUT = 28 * 28, 100, 10
    w1, b1 = _torch_linear_init(k_l1, D_IN, H)
    w2, b2 = _torch_linear_init(k_l2, H, D_OUT)
    params = prepare_fc_params(w1, b1, w2, b2)   # hoisted one-time weight prep

    # Small-batch check (single block, B == true batch).
    B = 8
    x = jax.random.normal(k_x, (B, D_IN), jnp.float32)
    out = jax.block_until_ready(fc_forward(x, *params))
    ref = reference_forward(x, w1, b1, w2, b2)
    assert out.shape == (B, D_OUT)
    assert jnp.allclose(out, ref, atol=2e-2, rtol=2e-2), "mismatch vs reference (B=8)"

    # Multi-step + ragged-last-block check (3 grid steps of 16; last block partial).
    B2 = 40
    x2 = jax.random.normal(k_x2, (B2, D_IN), jnp.float32)
    out2 = jax.block_until_ready(fc_forward(x2, *params, tile_b=16))
    ref2 = reference_forward(x2, w1, b1, w2, b2)
    assert out2.shape == (B2, D_OUT)
    assert jnp.allclose(out2, ref2, atol=2e-2, rtol=2e-2), "mismatch vs reference (B=40)"

    print("KERNEL_OK")
</pallas_src>

<mosaic_0001>
module attributes {stable_mosaic.version = 11 : i64} {
  func.func @fc_kernel(%arg0: i32, %arg1: memref<8x784xf32, #tpu.memory_space<vmem>>, %arg2: memref<784x128xbf16, #tpu.memory_space<vmem>>, %arg3: memref<1x128xf32, #tpu.memory_space<vmem>>, %arg4: memref<128x10xbf16, #tpu.memory_space<vmem>>, %arg5: memref<1x10xf32, #tpu.memory_space<vmem>>, %arg6: memref<8x10xf32, #tpu.memory_space<vmem>>) attributes {dimension_semantics = [#tpu.dimension_semantics<parallel>], iteration_bounds = array<i64: 1>, scalar_prefetch = 0 : i64, scratch_operands = 0 : i64, tpu.core_type = #tpu.core_type<tc>, window_params = [{transform_indices = @transform_0, window_bounds = array<i64: 8, 784>}, {pipeline_mode = #tpu.pipeline_mode<synchronous>, transform_indices = @transform_1, window_bounds = array<i64: 784, 128>}, {pipeline_mode = #tpu.pipeline_mode<synchronous>, transform_indices = @transform_2, window_bounds = array<i64: 1, 128>}, {pipeline_mode = #tpu.pipeline_mode<synchronous>, transform_indices = @transform_3, window_bounds = array<i64: 128, 10>}, {pipeline_mode = #tpu.pipeline_mode<synchronous>, transform_indices = @transform_4, window_bounds = array<i64: 1, 10>}, {transform_indices = @transform_5, window_bounds = array<i64: 8, 10>}]} {
    %c0 = arith.constant 0 : index
    %c0_0 = arith.constant 0 : index
    %0 = vector.load %arg1[%c0, %c0_0] : memref<8x784xf32, #tpu.memory_space<vmem>>, vector<8x784xf32>
    %1 = arith.truncf %0 : vector<8x784xf32> to vector<8x784xbf16>
    %c0_1 = arith.constant 0 : index
    %c0_2 = arith.constant 0 : index
    %2 = vector.load %arg2[%c0_1, %c0_2] : memref<784x128xbf16, #tpu.memory_space<vmem>>, vector<784x128xbf16>
    %cst = arith.constant dense<0.000000e+00> : vector<8x128xf32>
    %3 = tpu.matmul %1, %2, %cst {dimension_numbers = #tpu.dot_dimension_numbers<[1], [0], [0], [1], [0, 0, 1, 1], [], []>} : vector<8x784xbf16>, vector<784x128xbf16>, vector<8x128xf32> -> vector<8x128xf32>
    %c0_3 = arith.constant 0 : index
    %c0_4 = arith.constant 0 : index
    %4 = vector.load %arg3[%c0_3, %c0_4] : memref<1x128xf32, #tpu.memory_space<vmem>>, vector<1x128xf32>
    %5 = vector.broadcast %4 : vector<1x128xf32> to vector<8x128xf32>
    %6 = arith.addf %3, %5 : vector<8x128xf32>
    %cst_5 = arith.constant 0.000000e+00 : f32
    %7 = vector.broadcast %cst_5 : f32 to vector<8x128xf32>
    %8 = arith.cmpf oge, %6, %7 : vector<8x128xf32>
    %cst_6 = arith.constant 0.00999999977 : f32
    %9 = vector.broadcast %cst_6 : f32 to vector<8x128xf32>
    %10 = arith.mulf %9, %6 : vector<8x128xf32>
    %11 = arith.select %8, %6, %10 : vector<8x128xi1>, vector<8x128xf32>
    %12 = arith.truncf %11 : vector<8x128xf32> to vector<8x128xbf16>
    %c0_7 = arith.constant 0 : index
    %c0_8 = arith.constant 0 : index
    %13 = vector.load %arg4[%c0_7, %c0_8] : memref<128x10xbf16, #tpu.memory_space<vmem>>, vector<128x10xbf16>
    %cst_9 = arith.constant dense<0.000000e+00> : vector<8x10xf32>
    %14 = tpu.matmul %12, %13, %cst_9 {dimension_numbers = #tpu.dot_dimension_numbers<[1], [0], [0], [1], [0, 0, 1, 1], [], []>} : vector<8x128xbf16>, vector<128x10xbf16>, vector<8x10xf32> -> vector<8x10xf32>
    %c0_10 = arith.constant 0 : index
    %c0_11 = arith.constant 0 : index
    %15 = vector.load %arg5[%c0_10, %c0_11] : memref<1x10xf32, #tpu.memory_space<vmem>>, vector<1x10xf32>
    %16 = vector.broadcast %15 : vector<1x10xf32> to vector<8x10xf32>
    %17 = arith.addf %14, %16 : vector<8x10xf32>
    %cst_12 = arith.constant 0.000000e+00 : f32
    %18 = vector.broadcast %cst_12 : f32 to vector<8x10xf32>
    %19 = arith.cmpf oge, %17, %18 : vector<8x10xf32>
    %cst_13 = arith.constant 0.00999999977 : f32
    %20 = vector.broadcast %cst_13 : f32 to vector<8x10xf32>
    %21 = arith.mulf %20, %17 : vector<8x10xf32>
    %22 = arith.select %19, %17, %21 : vector<8x10xi1>, vector<8x10xf32>
    %c0_14 = arith.constant 0 : index
    %c0_15 = arith.constant 0 : index
    %23 = vector.load %arg6[%c0_14, %c0_15] : memref<8x10xf32, #tpu.memory_space<vmem>>, vector<8x10xf32>
    tpu.vector_store %arg6[%c0_14, %c0_15], %22 {strides = array<i32>} : memref<8x10xf32, #tpu.memory_space<vmem>>, vector<8x10xf32>,
    return
  }
  func.func @transform_0(%arg0: i32) -> (i32, i32) {
    %c0_i32 = arith.constant 0 : i32
    %c0_i32_0 = arith.constant 0 : i32
    return %arg0, %c0_i32 : i32, i32
  }
  func.func @transform_1(%arg0: i32) -> (i32, i32) {
    %c0_i32 = arith.constant 0 : i32
    %c0_i32_0 = arith.constant 0 : i32
    %c0_i32_1 = arith.constant 0 : i32
    return %c0_i32, %c0_i32_0 : i32, i32
  }
  func.func @transform_2(%arg0: i32) -> (i32, i32) {
    %c0_i32 = arith.constant 0 : i32
    %c0_i32_0 = arith.constant 0 : i32
    %c0_i32_1 = arith.constant 0 : i32
    return %c0_i32, %c0_i32_0 : i32, i32
  }
  func.func @transform_3(%arg0: i32) -> (i32, i32) {
    %c0_i32 = arith.constant 0 : i32
    %c0_i32_0 = arith.constant 0 : i32
    %c0_i32_1 = arith.constant 0 : i32
    return %c0_i32, %c0_i32_0 : i32, i32
  }
  func.func @transform_4(%arg0: i32) -> (i32, i32) {
    %c0_i32 = arith.constant 0 : i32
    %c0_i32_0 = arith.constant 0 : i32
    %c0_i32_1 = arith.constant 0 : i32
    return %c0_i32, %c0_i32_0 : i32, i32
  }
  func.func @transform_5(%arg0: i32) -> (i32, i32) {
    %c0_i32 = arith.constant 0 : i32
    %c0_i32_0 = arith.constant 0 : i32
    return %arg0, %c0_i32 : i32, i32
  }
}

</mosaic_0001>

<llo_original>
// kernel: tpu_custom_call.1
$region0: #{tpu_custom_call.1}
  #allocation0 [shape = 'u32[]', space=smem, size = 0x4, offset = 0x4, fixed_abs, tag = 'smem constant byte address 0x4 - core index']
  #allocation1 [shape = 'u32[144,128]{1,0:T(1,128)}', space=vmem, size = 0x12000, scoped, tag = 'internal scratch']
  %s0 = inlined_call_operand.vmem [shape: f32[8,784], index: 0, kind: input, shape index: {}]
  %s1 = inlined_call_operand.hbm [shape: bf16[784,128], index: 1, kind: input, shape index: {}]
  %s2 = inlined_call_operand.vmem [shape: f32[1,128], index: 2, kind: input, shape index: {}]
  %s3 = inlined_call_operand.vmem [shape: bf16[128,10], index: 3, kind: input, shape index: {}]
  %s4 = inlined_call_operand.vmem [shape: f32[1,10], index: 4, kind: input, shape index: {}]
  %s5 = inlined_call_operand.hbm [shape: f32[8,10], index: 5, kind: output, shape index: {}]
  %s6 = sld [smem:[#allocation0]]
  $region34: #{tpu_custom_call.1} parent=0
    _
  %s8 = ssub.s32 1, %s6
  %s9 = scalar_select 0, %s8, %s6
  $region1: #{tpu_custom_call.1} parent=0
    #allocation2 [shape = 'u8[200704]{0}', space=vmem, size = 0x31000, scoped, tag = 'input window, operand 1, single buffered']
    #allocation3 [shape = 's32[1]{0}', space=sflag, size = 0x4, scoped, tag = 'scoped memory for tpu_custom_call.1']
    #allocation4 [shape = 's32[1]{0}', space=sflag, size = 0x4, scoped, tag = 'scoped memory for tpu_custom_call.1']
    #allocation5 [shape = 'u8[4096]{0}', space=vmem, size = 0x1000, scoped, tag = 'output window, operand 0, single buffered']
    %10 = vsyncpa [#allocation3], 0
    %11 = vsyncpa [#allocation4], 0
    // Predicated region
    $region2: #{tpu_custom_call.1} parent=1 // pred_check
      _
    $region3: #{tpu_custom_call.1} parent=1 // pred_check_branch
      %13 = sbr.rel (0) target = $region5
    $region4: #{tpu_custom_call.1} parent=1 // pred_region
      _
    $region5: #{tpu_custom_call.1} parent=1 // pred_fallthru
      _
    // Predicated region
    $region6: #{tpu_custom_call.1} parent=1 // pred_check
      _
    $region7: #{tpu_custom_call.1} parent=1 // pred_check_branch
      %15 = sbr.rel (0) target = $region9
    $region8: #{tpu_custom_call.1} parent=1 // pred_region
      %s17 = ssub.s32 6272, 6272
      %18 = vsyncadd [#allocation3], %s17
      %s19 = sshll.u32 [#allocation2], 4
      %s20 = int_to_ptr.vmem [resolvable:$true] %s19
      %25 = dma.hbm_to_vmem [thread:$0]  %s1, 6272, %s20, [#allocation3], 64, 64, 4
    $region9: #{tpu_custom_call.1} parent=1 // pred_fallthru
      _
    // Predicated region
    $region10: #{tpu_custom_call.1} parent=1 // pred_check
      _
    $region11: #{tpu_custom_call.1} parent=1 // pred_check_branch
      %27 = sbr.rel (0) target = $region13
    $region12: #{tpu_custom_call.1} parent=1 // pred_region
      _
    $region13: #{tpu_custom_call.1} parent=1 // pred_fallthru
      _
    // Predicated region
    $region14: #{tpu_custom_call.1} parent=1 // pred_check
      _
    $region15: #{tpu_custom_call.1} parent=1 // pred_check_branch
      %29 = sbr.rel (0) target = $region17
    $region16: #{tpu_custom_call.1} parent=1 // pred_region
      _
    $region17: #{tpu_custom_call.1} parent=1 // pred_fallthru
      _
    // Predicated region
    $region18: #{tpu_custom_call.1} parent=1 // pred_check
      _
    $region19: #{tpu_custom_call.1} parent=1 // pred_check_branch
      %31 = sbr.rel (0) target = $region21
    $region20: #{tpu_custom_call.1} parent=1 // pred_region
      _
    $region21: #{tpu_custom_call.1} parent=1 // pred_fallthru
      _
    // Predicated region
    $region22: #{tpu_custom_call.1} parent=1 // pred_check
      _
    $region23: #{tpu_custom_call.1} parent=1 // pred_check_branch
      %33 = sbr.rel (0) target = $region25
    $region24: #{tpu_custom_call.1} parent=1 // pred_region
      %34 = dma.done [#allocation3], 6272
    $region25: #{tpu_custom_call.1} parent=1 // pred_fallthru
      _
    %v36 = vld [vmem:[%s0] sm:$0xff]
    %v37 = vld [vmem:[%s0 + $0x8] sm:$0xff]
    %v38 = vld [vmem:[%s0 + $0x10] sm:$0xff]
    %v39 = vld [vmem:[%s0 + $0x18] sm:$0xff]
    %v40 = vld [vmem:[%s0 + $0x20] sm:$0xff]
    %v41 = vld [vmem:[%s0 + $0x28] sm:$0xff]
    %v42 = vld [vmem:[%s0 + $0x30] sm:$0xff]
    %v43 = vpack.c.bf16 %v36, %v36
    %v44 = vpack.c.bf16 %v37, %v37
    %v45 = vpack.c.bf16 %v38, %v38
    %v46 = vpack.c.bf16 %v39, %v39
    %v47 = vpack.c.bf16 %v40, %v40
    %v48 = vpack.c.bf16 %v41, %v41
    %v49 = vpack.c.bf16 %v42, %v42
    %v50 = vld [vmem:[#allocation2] sm:$0xf]
    %v51 = vld [vmem:[#allocation2 + $0x4] sm:$0xf]
    %v52 = vld [vmem:[#allocation2 + $0x8] sm:$0xf]
    %v53 = vld [vmem:[#allocation2 + $0xc] sm:$0xf]
    %v54 = vld [vmem:[#allocation2 + $0x10] sm:$0xf]
    %v55 = vld [vmem:[#allocation2 + $0x14] sm:$0xf]
    %v56 = vld [vmem:[#allocation2 + $0x18] sm:$0xf]
    %v57 = vld [vmem:[#allocation2 + $0x1c] sm:$0xf]
    %v58 = vld [vmem:[#allocation2 + $0x20] sm:$0xf]
    %v59 = vld [vmem:[#allocation2 + $0x24] sm:$0xf]
    %v60 = vld [vmem:[#allocation2 + $0x28] sm:$0xf]
    %v61 = vld [vmem:[#allocation2 + $0x2c] sm:$0xf]
    %v62 = vld [vmem:[#allocation2 + $0x30] sm:$0xf]
    %v63 = vld [vmem:[#allocation2 + $0x34] sm:$0xf]
    %v64 = vld [vmem:[#allocation2 + $0x38] sm:$0xf]
    %v65 = vld [vmem:[#allocation2 + $0x3c] sm:$0xf]
    %v66 = vld [vmem:[#allocation2 + $0x40] sm:$0xf]
    %v67 = vld [vmem:[#allocation2 + $0x44] sm:$0xf]
    %v68 = vld [vmem:[#allocation2 + $0x48] sm:$0xf]
    %v69 = vld [vmem:[#allocation2 + $0x4c] sm:$0xf]
    %v70 = vld [vmem:[#allocation2 + $0x50] sm:$0xf]
    %v71 = vld [vmem:[#allocation2 + $0x54] sm:$0xf]
    %v72 = vld [vmem:[#allocation2 + $0x58] sm:$0xf]
    %v73 = vld [vmem:[#allocation2 + $0x5c] sm:$0xf]
    %v74 = vld [vmem:[#allocation2 + $0x60] sm:$0xf]
    %v75 = vld [vmem:[#allocation2 + $0x64] sm:$0xf]
    %v76 = vld [vmem:[#allocation2 + $0x68] sm:$0xf]
    %v77 = vld [vmem:[#allocation2 + $0x6c] sm:$0xf]
    %v78 = vld [vmem:[#allocation2 + $0x70] sm:$0xf]
    %v79 = vld [vmem:[#allocation2 + $0x74] sm:$0xf]
    %v80 = vld [vmem:[#allocation2 + $0x78] sm:$0xf]
    %v81 = vld [vmem:[#allocation2 + $0x7c] sm:$0xf]
    %v82 = vld [vmem:[#allocation2 + $0x80] sm:$0xf]
    %v83 = vld [vmem:[#allocation2 + $0x84] sm:$0xf]
    %v84 = vld [vmem:[#allocation2 + $0x88] sm:$0xf]
    %v85 = vld [vmem:[#allocation2 + $0x8c] sm:$0xf]
    %v86 = vld [vmem:[#allocation2 + $0x90] sm:$0xf]
    %v87 = vld [vmem:[#allocation2 + $0x94] sm:$0xf]
    %v88 = vld [vmem:[#allocation2 + $0x98] sm:$0xf]
    %v89 = vld [vmem:[#allocation2 + $0x9c] sm:$0xf]
    %v90 = vld [vmem:[#allocation2 + $0xa0] sm:$0xf]
    %v91 = vld [vmem:[#allocation2 + $0xa4] sm:$0xf]
    %v92 = vld [vmem:[#allocation2 + $0xa8] sm:$0xf]
    %v93 = vld [vmem:[#allocation2 + $0xac] sm:$0xf]
    %v94 = vld [vmem:[#allocation2 + $0xb0] sm:$0xf]
    %v95 = vld [vmem:[#allocation2 + $0xb4] sm:$0xf]
    %v96 = vld [vmem:[#allocation2 + $0xb8] sm:$0xf]
    %v97 = vld [vmem:[#allocation2 + $0xbc] sm:$0xf]
    %v98 = vld [vmem:[#allocation2 + $0xc0] sm:$0xf]
    %v99 = vld [vmem:[#allocation2 + $0xc4] sm:$0xf]
    %v100 = vld [vmem:[#allocation2 + $0xc8] sm:$0xf]
    %v101 = vld [vmem:[#allocation2 + $0xcc] sm:$0xf]
    %v102 = vld [vmem:[#allocation2 + $0xd0] sm:$0xf]
    %v103 = vld [vmem:[#allocation2 + $0xd4] sm:$0xf]
    %v104 = vld [vmem:[#allocation2 + $0xd8] sm:$0xf]
    %v105 = vld [vmem:[#allocation2 + $0xdc] sm:$0xf]
    %v106 = vld [vmem:[#allocation2 + $0xe0] sm:$0xf]
    %v107 = vld [vmem:[#allocation2 + $0xe4] sm:$0xf]
    %v108 = vld [vmem:[#allocation2 + $0xe8] sm:$0xf]
    %v109 = vld [vmem:[#allocation2 + $0xec] sm:$0xf]
    %v110 = vld [vmem:[#allocation2 + $0xf0] sm:$0xf]
    %v111 = vld [vmem:[#allocation2 + $0xf4] sm:$0xf]
    %v112 = vld [vmem:[#allocation2 + $0xf8] sm:$0xf]
    %v113 = vld [vmem:[#allocation2 + $0xfc] sm:$0xf]
    %v114 = vld [vmem:[#allocation2 + $0x100] sm:$0xf]
    %v115 = vld [vmem:[#allocation2 + $0x104] sm:$0xf]
    %v116 = vld [vmem:[#allocation2 + $0x108] sm:$0xf]
    %v117 = vld [vmem:[#allocation2 + $0x10c] sm:$0xf]
    %v118 = vld [vmem:[#allocation2 + $0x110] sm:$0xf]
    %v119 = vld [vmem:[#allocation2 + $0x114] sm:$0xf]
    %v120 = vld [vmem:[#allocation2 + $0x118] sm:$0xf]
    %v121 = vld [vmem:[#allocation2 + $0x11c] sm:$0xf]
    %v122 = vld [vmem:[#allocation2 + $0x120] sm:$0xf]
    %v123 = vld [vmem:[#allocation2 + $0x124] sm:$0xf]
    %v124 = vld [vmem:[#allocation2 + $0x128] sm:$0xf]
    %v125 = vld [vmem:[#allocation2 + $0x12c] sm:$0xf]
    %v126 = vld [vmem:[#allocation2 + $0x130] sm:$0xf]
    %v127 = vld [vmem:[#allocation2 + $0x134] sm:$0xf]
    %v128 = vld [vmem:[#allocation2 + $0x138] sm:$0xf]
    %v129 = vld [vmem:[#allocation2 + $0x13c] sm:$0xf]
    %v130 = vld [vmem:[#allocation2 + $0x140] sm:$0xf]
    %v131 = vld [vmem:[#allocation2 + $0x144] sm:$0xf]
    %v132 = vld [vmem:[#allocation2 + $0x148] sm:$0xf]
    %v133 = vld [vmem:[#allocation2 + $0x14c] sm:$0xf]
    %v134 = vld [vmem:[#allocation2 + $0x150] sm:$0xf]
    %v135 = vld [vmem:[#allocation2 + $0x154] sm:$0xf]
    %v136 = vld [vmem:[#allocation2 + $0x158] sm:$0xf]
    %v137 = vld [vmem:[#allocation2 + $0x15c] sm:$0xf]
    %v138 = vld [vmem:[#allocation2 + $0x160] sm:$0xf]
    %v139 = vld [vmem:[#allocation2 + $0x164] sm:$0xf]
    %v140 = vld [vmem:[#allocation2 + $0x168] sm:$0xf]
    %v141 = vld [vmem:[#allocation2 + $0x16c] sm:$0xf]
    %v142 = vld [vmem:[#allocation2 + $0x170] sm:$0xf]
    %v143 = vld [vmem:[#allocation2 + $0x174] sm:$0xf]
    %v144 = vld [vmem:[#allocation2 + $0x178] sm:$0xf]
    %v145 = vld [vmem:[#allocation2 + $0x17c] sm:$0xf]
    %v146 = vld [vmem:[#allocation2 + $0x180] sm:$0xf]
    %v147 = vld [vmem:[#allocation2 + $0x184] sm:$0xf]
    %v148 = vld [vmem:[%s2] sm:$0x1]
    %v150 = vlaneseq
    %v151 = vshrl.u32 %v150, 7
    %v152 = vsub.s32 0, %v151
    %v153 = vrot.slane %v148, %v152
    %v253 = vunpack.c.l.b16 %v50
    %v254 = vunpack.c.l.b16 %v51
    %v255 = vunpack.c.l.b16 %v52
    %v256 = vunpack.c.l.b16 %v53
    %v257 = vunpack.c.l.b16 %v54
    %v258 = vunpack.c.l.b16 %v55
    %v259 = vunpack.c.l.b16 %v56
    %v260 = vunpack.c.l.b16 %v57
    %v261 = vunpack.c.l.b16 %v58
    %v262 = vunpack.c.l.b16 %v59
    %v263 = vunpack.c.l.b16 %v60
    %v264 = vunpack.c.l.b16 %v61
    %v265 = vunpack.c.l.b16 %v62
    %v266 = vunpack.c.l.b16 %v63
    %v267 = vunpack.c.l.b16 %v64
    %v268 = vunpack.c.l.b16 %v65
    %v269 = vunpack.c.l.b16 %v66
    %v270 = vunpack.c.l.b16 %v67
    %v271 = vunpack.c.l.b16 %v68
    %v272 = vunpack.c.l.b16 %v69
    %v273 = vunpack.c.l.b16 %v70
    %v274 = vunpack.c.l.b16 %v71
    %v275 = vunpack.c.l.b16 %v72
    %v276 = vunpack.c.l.b16 %v73
    %v277 = vunpack.c.l.b16 %v74
    %v278 = vunpack.c.l.b16 %v75
    %v279 = vunpack.c.l.b16 %v76
    %v280 = vunpack.c.l.b16 %v77
    %v281 = vunpack.c.l.b16 %v78
    %v282 = vunpack.c.l.b16 %v79
    %v283 = vunpack.c.l.b16 %v80
    %v284 = vunpack.c.l.b16 %v81
    %v285 = vunpack.c.l.b16 %v82
    %v286 = vunpack.c.l.b16 %v83
    %v287 = vunpack.c.l.b16 %v84
    %v288 = vunpack.c.l.b16 %v85
    %v289 = vunpack.c.l.b16 %v86
    %v290 = vunpack.c.l.b16 %v87
    %v291 = vunpack.c.l.b16 %v88
    %v292 = vunpack.c.l.b16 %v89
    %v293 = vunpack.c.l.b16 %v90
    %v294 = vunpack.c.l.b16 %v91
    %v295 = vunpack.c.l.b16 %v92
    %v296 = vunpack.c.l.b16 %v93
    %v297 = vunpack.c.l.b16 %v94
    %v298 = vunpack.c.l.b16 %v95
    %v299 = vunpack.c.l.b16 %v96
    %v300 = vunpack.c.l.b16 %v97
    %v301 = vunpack.c.l.b16 %v98
    %v302 = vunpack.c.l.b16 %v99
    %v303 = vunpack.c.l.b16 %v100
    %v304 = vunpack.c.l.b16 %v101
    %v305 = vunpack.c.l.b16 %v102
    %v306 = vunpack.c.l.b16 %v103
    %v307 = vunpack.c.l.b16 %v104
    %v308 = vunpack.c.l.b16 %v105
    %v309 = vunpack.c.l.b16 %v106
    %v310 = vunpack.c.l.b16 %v107
    %v311 = vunpack.c.l.b16 %v108
    %v312 = vunpack.c.l.b16 %v109
    %v313 = vunpack.c.l.b16 %v110
    %v314 = vunpack.c.l.b16 %v111
    %v315 = vunpack.c.l.b16 %v112
    %v316 = vunpack.c.l.b16 %v113
    %v317 = vunpack.c.l.b16 %v114
    %v318 = vunpack.c.l.b16 %v115
    %v319 = vunpack.c.l.b16 %v116
    %v320 = vunpack.c.l.b16 %v117
    %v321 = vunpack.c.l.b16 %v118
    %v322 = vunpack.c.l.b16 %v119
    %v323 = vunpack.c.l.b16 %v120
    %v324 = vunpack.c.l.b16 %v121
    %v325 = vunpack.c.l.b16 %v122
    %v326 = vunpack.c.l.b16 %v123
    %v327 = vunpack.c.l.b16 %v124
    %v328 = vunpack.c.l.b16 %v125
    %v329 = vunpack.c.l.b16 %v126
    %v330 = vunpack.c.l.b16 %v127
    %v331 = vunpack.c.l.b16 %v128
    %v332 = vunpack.c.l.b16 %v129
    %v333 = vunpack.c.l.b16 %v130
    %v334 = vunpack.c.l.b16 %v131
    %v335 = vunpack.c.l.b16 %v132
    %v336 = vunpack.c.l.b16 %v133
    %v337 = vunpack.c.l.b16 %v134
    %v338 = vunpack.c.l.b16 %v135
    %v339 = vunpack.c.l.b16 %v136
    %v340 = vunpack.c.l.b16 %v137
    %v341 = vunpack.c.l.b16 %v138
    %v342 = vunpack.c.l.b16 %v139
    %v343 = vunpack.c.l.b16 %v140
    %v344 = vunpack.c.l.b16 %v141
    %v345 = vunpack.c.l.b16 %v142
    %v346 = vunpack.c.l.b16 %v143
    %v347 = vunpack.c.l.b16 %v144
    %v348 = vunpack.c.l.b16 %v145
    %v349 = vunpack.c.l.b16 %v146
    %v350 = vunpack.c.l.b16 %v147
    %v351 = vpack.c.b16 %v254, %v253
    %v352 = vpack.c.b16 %v256, %v255
    %v353 = vpack.c.b16 %v258, %v257
    %v354 = vpack.c.b16 %v260, %v259
    %v355 = vpack.c.b16 %v262, %v261
    %v356 = vpack.c.b16 %v264, %v263
    %v357 = vpack.c.b16 %v266, %v265
    %v358 = vpack.c.b16 %v268, %v267
    %v359 = vpack.c.b16 %v270, %v269
    %v360 = vpack.c.b16 %v272, %v271
    %v361 = vpack.c.b16 %v274, %v273
    %v362 = vpack.c.b16 %v276, %v275
    %v363 = vpack.c.b16 %v278, %v277
    %v364 = vpack.c.b16 %v280, %v279
    %v365 = vpack.c.b16 %v282, %v281
    %v366 = vpack.c.b16 %v284, %v283
    %v367 = vpack.c.b16 %v286, %v285
    %v368 = vpack.c.b16 %v288, %v287
    %v369 = vpack.c.b16 %v290, %v289
    %v370 = vpack.c.b16 %v292, %v291
    %v371 = vpack.c.b16 %v294, %v293
    %v372 = vpack.c.b16 %v296, %v295
    %v373 = vpack.c.b16 %v298, %v297
    %v374 = vpack.c.b16 %v300, %v299
    %v375 = vpack.c.b16 %v302, %v301
    %v376 = vpack.c.b16 %v304, %v303
    %v377 = vpack.c.b16 %v306, %v305
    %v378 = vpack.c.b16 %v308, %v307
    %v379 = vpack.c.b16 %v310, %v309
    %v380 = vpack.c.b16 %v312, %v311
    %v381 = vpack.c.b16 %v314, %v313
    %v382 = vpack.c.b16 %v316, %v315
    %v383 = vpack.c.b16 %v318, %v317
    %v384 = vpack.c.b16 %v320, %v319
    %v385 = vpack.c.b16 %v322, %v321
    %v386 = vpack.c.b16 %v324, %v323
    %v387 = vpack.c.b16 %v326, %v325
    %v388 = vpack.c.b16 %v328, %v327
    %v389 = vpack.c.b16 %v330, %v329
    %v390 = vpack.c.b16 %v332, %v331
    %v391 = vpack.c.b16 %v334, %v333
    %v392 = vpack.c.b16 %v336, %v335
    %v393 = vpack.c.b16 %v338, %v337
    %v394 = vpack.c.b16 %v340, %v339
    %v395 = vpack.c.b16 %v342, %v341
    %v396 = vpack.c.b16 %v344, %v343
    %v397 = vpack.c.b16 %v346, %v345
    %v398 = vpack.c.b16 %v348, %v347
    %v399 = vpack.c.b16 %v350, %v349
    %vm449 = vcmask 130048
    %v451 = vsel %vm449, %v49, 0
    %453 = vmatprep.subr.bf16.mxu0 0
    %454 = vmatpush1.bf16.msra.mxu0 %v358
    %455 = vmatprep.subr.bf16.mxu0 0
    %456 = vmatpush1.bf16.msra.mxu0 %v357
    %457 = vmatprep.subr.bf16.mxu0 0
    %458 = vmatpush1.bf16.msra.mxu0 %v356
    %459 = vmatprep.subr.bf16.mxu0 0
    %460 = vmatpush1.bf16.msra.mxu0 %v355
    %461 = vmatprep.subr.bf16.mxu0 0
    %462 = vmatpush1.bf16.msra.mxu0 %v354
    %463 = vmatprep.subr.bf16.mxu0 0
    %464 = vmatpush1.bf16.msra.mxu0 %v353
    %465 = vmatprep.subr.bf16.mxu0 0
    %466 = vmatpush1.bf16.msra.mxu0 %v352
    %467 = vmatprep.subr.bf16.mxu0 0
    %468 = vmatpush1.bf16.msra.mxu0 %v351
    %469 = vmatprep.subr.bf16.mxu0 0
    %470 = vmatpush2.bf16.msra.mxu0 %v366
    %471 = vmatprep.subr.bf16.mxu0 0
    %472 = vmatpush2.bf16.msra.mxu0 %v365
    %473 = vmatprep.subr.bf16.mxu0 0
    %474 = vmatpush2.bf16.msra.mxu0 %v364
    %475 = vmatprep.subr.bf16.mxu0 0
    %476 = vmatpush2.bf16.msra.mxu0 %v363
    %477 = vmatprep.subr.bf16.mxu0 0
    %478 = vmatpush2.bf16.msra.mxu0 %v362
    %479 = vmatprep.subr.bf16.mxu0 0
    %480 = vmatpush2.bf16.msra.mxu0 %v361
    %481 = vmatprep.subr.bf16.mxu0 0
    %482 = vmatpush2.bf16.msra.mxu0 %v360
    %483 = vmatprep.subr.bf16.mxu0 0
    %484 = vmatpush2.bf16.msra.mxu0 %v359
    %485 = vmatprep.mubr.bf16.mxu0 %v44
    %486 = vmatmul.mubr.bf16.gmra.mxu0 %v43
    %v487 = vpop.f32.mrf.mxu0
    %v488 = vadd.f32 %v153, %v487
    %v489 = vpop.f32.mrf.mxu0
    %v490 = vpop.f32.mrf.mxu0
    %v491 = vpop.f32.mrf.mxu0
    %492 = vdwg.mxu0
    %493 = vmatprep.subr.bf16.mxu0 0
    %494 = vmatpush1.bf16.msra.mxu0 %v374
    %495 = vmatprep.subr.bf16.mxu0 0
    %496 = vmatpush1.bf16.msra.mxu0 %v373
    %497 = vmatprep.subr.bf16.mxu0 0
    %498 = vmatpush1.bf16.msra.mxu0 %v372
    %499 = vmatprep.subr.bf16.mxu0 0
    %500 = vmatpush1.bf16.msra.mxu0 %v371
    %501 = vmatprep.subr.bf16.mxu0 0
    %502 = vmatpush1.bf16.msra.mxu0 %v370
    %503 = vmatprep.subr.bf16.mxu0 0
    %504 = vmatpush1.bf16.msra.mxu0 %v369
    %505 = vmatprep.subr.bf16.mxu0 0
    %506 = vmatpush1.bf16.msra.mxu0 %v368
    %507 = vmatprep.subr.bf16.mxu0 0
    %508 = vmatpush1.bf16.msra.mxu0 %v367
    %509 = vmatprep.subr.bf16.mxu0 0
    %510 = vmatpush2.bf16.msra.mxu0 %v382
    %511 = vmatprep.subr.bf16.mxu0 0
    %512 = vmatpush2.bf16.msra.mxu0 %v381
    %513 = vmatprep.subr.bf16.mxu0 0
    %514 = vmatpush2.bf16.msra.mxu0 %v380
    %515 = vmatprep.subr.bf16.mxu0 0
    %516 = vmatpush2.bf16.msra.mxu0 %v379
    %517 = vmatprep.subr.bf16.mxu0 0
    %518 = vmatpush2.bf16.msra.mxu0 %v378
    %519 = vmatprep.subr.bf16.mxu0 0
    %520 = vmatpush2.bf16.msra.mxu0 %v377
    %521 = vmatprep.subr.bf16.mxu0 0
    %522 = vmatpush2.bf16.msra.mxu0 %v376
    %523 = vmatprep.subr.bf16.mxu0 0
    %524 = vmatpush2.bf16.msra.mxu0 %v375
    %525 = vmatprep.mubr.bf16.mxu0 %v46
    %526 = vmatmul.mubr.bf16.gmra.mxu0 %v45
    %v527 = vpop.f32.mrf.mxu0
    %v528 = vadd.f32 %v488, %v527
    %v529 = vpop.f32.mrf.mxu0
    %v530 = vpop.f32.mrf.mxu0
    %v531 = vpop.f32.mrf.mxu0
    %532 = vdwg.mxu0
    %533 = vmatprep.subr.bf16.mxu0 0
    %534 = vmatpush1.bf16.msra.mxu0 %v390
    %535 = vmatprep.subr.bf16.mxu0 0
    %536 = vmatpush1.bf16.msra.mxu0 %v389
    %537 = vmatprep.subr.bf16.mxu0 0
    %538 = vmatpush1.bf16.msra.mxu0 %v388
    %539 = vmatprep.subr.bf16.mxu0 0
    %540 = vmatpush1.bf16.msra.mxu0 %v387
    %541 = vmatprep.subr.bf16.mxu0 0
    %542 = vmatpush1.bf16.msra.mxu0 %v386
    %543 = vmatprep.subr.bf16.mxu0 0
    %544 = vmatpush1.bf16.msra.mxu0 %v385
    %545 = vmatprep.subr.bf16.mxu0 0
    %546 = vmatpush1.bf16.msra.mxu0 %v384
    %547 = vmatprep.subr.bf16.mxu0 0
    %548 = vmatpush1.bf16.msra.mxu0 %v383
    %549 = vmatprep.subr.bf16.mxu0 0
    %550 = vmatpush2.bf16.msra.mxu0 %v398
    %551 = vmatprep.subr.bf16.mxu0 0
    %552 = vmatpush2.bf16.msra.mxu0 %v397
    %553 = vmatprep.subr.bf16.mxu0 0
    %554 = vmatpush2.bf16.msra.mxu0 %v396
    %555 = vmatprep.subr.bf16.mxu0 0
    %556 = vmatpush2.bf16.msra.mxu0 %v395
    %557 = vmatprep.subr.bf16.mxu0 0
    %558 = vmatpush2.bf16.msra.mxu0 %v394
    %559 = vmatprep.subr.bf16.mxu0 0
    %560 = vmatpush2.bf16.msra.mxu0 %v393
    %561 = vmatprep.subr.bf16.mxu0 0
    %562 = vmatpush2.bf16.msra.mxu0 %v392
    %563 = vmatprep.subr.bf16.mxu0 0
    %564 = vmatpush2.bf16.msra.mxu0 %v391
    %565 = vmatprep.mubr.bf16.mxu0 %v48
    %566 = vmatmul.mubr.bf16.gmra.mxu0 %v47
    %v567 = vpop.f32.mrf.mxu0
    %v568 = vadd.f32 %v528, %v567
    %v569 = vpop.f32.mrf.mxu0
    %v570 = vpop.f32.mrf.mxu0
    %v571 = vpop.f32.mrf.mxu0
    %572 = vdwg.mxu0
    %573 = vmatprep.subr.bf16.mxu0 0
    %574 = vmatpush1.bf16.msra.mxu0 0
    %575 = vmatprep.subr.bf16.mxu0 0
    %576 = vmatpush1.bf16.msra.mxu0 0
    %577 = vmatprep.subr.bf16.mxu0 0
    %578 = vmatpush1.bf16.msra.mxu0 0
    %579 = vmatprep.subr.bf16.mxu0 0
    %580 = vmatpush1.bf16.msra.mxu0 0
    %581 = vmatprep.subr.bf16.mxu0 0
    %582 = vmatpush1.bf16.msra.mxu0 0
    %583 = vmatprep.subr.bf16.mxu0 0
    %584 = vmatpush1.bf16.msra.mxu0 0
    %585 = vmatprep.subr.bf16.mxu0 0
    %586 = vmatpush1.bf16.msra.mxu0 0
    %587 = vmatprep.subr.bf16.mxu0 0
    %588 = vmatpush1.bf16.msra.mxu0 %v399
    %589 = vmatprep.subr.bf16.mxu0 0
    %590 = vmatpush2.bf16.msra.mxu0 0
    %591 = vmatprep.subr.bf16.mxu0 0
    %592 = vmatpush2.bf16.msra.mxu0 0
    %593 = vmatprep.subr.bf16.mxu0 0
    %594 = vmatpush2.bf16.msra.mxu0 0
    %595 = vmatprep.subr.bf16.mxu0 0
    %596 = vmatpush2.bf16.msra.mxu0 0
    %597 = vmatprep.subr.bf16.mxu0 0
    %598 = vmatpush2.bf16.msra.mxu0 0
    %599 = vmatprep.subr.bf16.mxu0 0
    %600 = vmatpush2.bf16.msra.mxu0 0
    %601 = vmatprep.subr.bf16.mxu0 0
    %602 = vmatpush2.bf16.msra.mxu0 0
    %603 = vmatprep.subr.bf16.mxu0 0
    %604 = vmatpush2.bf16.msra.mxu0 0
    %605 = vmatprep.mubr.bf16.mxu0 0
    %606 = vmatmul.mubr.bf16.gmra.mxu0 %v451
    %v607 = vpop.f32.mrf.mxu0
    %v608 = vadd.f32 %v568, %v607
    %v609 = vpop.f32.mrf.mxu0
    %v610 = vpop.f32.mrf.mxu0
    %v611 = vpop.f32.mrf.mxu0
    %612 = vdwg.mxu0
    %vm613 = vcmp.ge.f32.partialorder %v608, 0.0
    %v614 = vmul.f32 %v608, 0.01
    %v615 = vsel %vm613, %v608, %v614
    %v616 = vpack.c.bf16 %v615, %v615
    %v617 = vld [vmem:[%s3] sm:$0xf]
    %v618 = vld [vmem:[%s3 + $0x4] sm:$0xf]
    %v619 = vld [vmem:[%s3 + $0x8] sm:$0xf]
    %v620 = vld [vmem:[%s3 + $0xc] sm:$0xf]
    %v621 = vld [vmem:[%s3 + $0x10] sm:$0xf]
    %v622 = vld [vmem:[%s3 + $0x14] sm:$0xf]
    %v623 = vld [vmem:[%s3 + $0x18] sm:$0xf]
    %v624 = vld [vmem:[%s3 + $0x1c] sm:$0xf]
    %v625 = vld [vmem:[%s3 + $0x20] sm:$0xf]
    %v626 = vld [vmem:[%s3 + $0x24] sm:$0xf]
    %v627 = vld [vmem:[%s3 + $0x28] sm:$0xf]
    %v628 = vld [vmem:[%s3 + $0x2c] sm:$0xf]
    %v629 = vld [vmem:[%s3 + $0x30] sm:$0xf]
    %v630 = vld [vmem:[%s3 + $0x34] sm:$0xf]
    %v631 = vld [vmem:[%s3 + $0x38] sm:$0xf]
    %v632 = vld [vmem:[%s3 + $0x3c] sm:$0xf]
    %v633 = vld [vmem:[%s4] sm:$0x1]
    %v635 = vlaneseq
    %v636 = vshrl.u32 %v635, 7
    %v637 = vsub.s32 0, %v636
    %v638 = vrot.slane %v633, %v637
    %v656 = vunpack.c.l.b16 %v617
    %v657 = vunpack.c.l.b16 %v618
    %v658 = vunpack.c.l.b16 %v619
    %v659 = vunpack.c.l.b16 %v620
    %v660 = vunpack.c.l.b16 %v621
    %v661 = vunpack.c.l.b16 %v622
    %v662 = vunpack.c.l.b16 %v623
    %v663 = vunpack.c.l.b16 %v624
    %v664 = vunpack.c.l.b16 %v625
    %v665 = vunpack.c.l.b16 %v626
    %v666 = vunpack.c.l.b16 %v627
    %v667 = vunpack.c.l.b16 %v628
    %v668 = vunpack.c.l.b16 %v629
    %v669 = vunpack.c.l.b16 %v630
    %v670 = vunpack.c.l.b16 %v631
    %v671 = vunpack.c.l.b16 %v632
    %v672 = vpack.c.b16 %v657, %v656
    %v673 = vpack.c.b16 %v659, %v658
    %v674 = vpack.c.b16 %v661, %v660
    %v675 = vpack.c.b16 %v663, %v662
    %v676 = vpack.c.b16 %v665, %v664
    %v677 = vpack.c.b16 %v667, %v666
    %v678 = vpack.c.b16 %v669, %v668
    %v679 = vpack.c.b16 %v671, %v670
    %688 = vmatprep.subr.bf16.mxu0 0
    %689 = vmatpush1.bf16.msra.mxu0 %v679
    %690 = vmatprep.subr.bf16.mxu0 0
    %691 = vmatpush1.bf16.msra.mxu0 %v678
    %692 = vmatprep.subr.bf16.mxu0 0
    %693 = vmatpush1.bf16.msra.mxu0 %v677
    %694 = vmatprep.subr.bf16.mxu0 0
    %695 = vmatpush1.bf16.msra.mxu0 %v676
    %696 = vmatprep.subr.bf16.mxu0 0
    %697 = vmatpush1.bf16.msra.mxu0 %v675
    %698 = vmatprep.subr.bf16.mxu0 0
    %699 = vmatpush1.bf16.msra.mxu0 %v674
    %700 = vmatprep.subr.bf16.mxu0 0
    %701 = vmatpush1.bf16.msra.mxu0 %v673
    %702 = vmatprep.subr.bf16.mxu0 0
    %703 = vmatpush1.bf16.msra.mxu0 %v672
    %704 = vmatprep.subr.bf16.mxu0 0
    %705 = vmatpush2.bf16.msra.mxu0 0
    %706 = vmatprep.subr.bf16.mxu0 0
    %707 = vmatpush2.bf16.msra.mxu0 0
    %708 = vmatprep.subr.bf16.mxu0 0
    %709 = vmatpush2.bf16.msra.mxu0 0
    %710 = vmatprep.subr.bf16.mxu0 0
    %711 = vmatpush2.bf16.msra.mxu0 0
    %712 = vmatprep.subr.bf16.mxu0 0
    %713 = vmatpush2.bf16.msra.mxu0 0
    %714 = vmatprep.subr.bf16.mxu0 0
    %715 = vmatpush2.bf16.msra.mxu0 0
    %716 = vmatprep.subr.bf16.mxu0 0
    %717 = vmatpush2.bf16.msra.mxu0 0
    %718 = vmatprep.subr.bf16.mxu0 0
    %719 = vmatpush2.bf16.msra.mxu0 0
    %720 = vmatprep.mubr.bf16.mxu0 0
    %721 = vmatmul.mubr.bf16.gmra.mxu0 %v616
    %v722 = vpop.f32.mrf.mxu0
    %v723 = vadd.f32 %v638, %v722
    %v724 = vpop.f32.mrf.mxu0
    %v725 = vpop.f32.mrf.mxu0
    %v726 = vpop.f32.mrf.mxu0
    %727 = vdwg.mxu0
    %vm728 = vcmp.ge.f32.partialorder %v723, 0.0
    %v729 = vmul.f32 %v723, 0.01
    %v730 = vsel %vm728, %v723, %v729
    %vm731 = vcmask 80896
    %732 = vst.msk [vmem:[#allocation5] sm:$0xff] %vm731, %v730
    // Predicated region
    $region26: #{tpu_custom_call.1} parent=1 // pred_check
      _
    $region27: #{tpu_custom_call.1} parent=1 // pred_check_branch
      %734 = sbr.rel (0) target = $region29
    $region28: #{tpu_custom_call.1} parent=1 // pred_region
      %s736 = ssub.s32 128, 128
      %737 = vsyncadd [#allocation4], %s736
      %s739 = sshll.u32 [#allocation5], 4
      %s740 = int_to_ptr.vmem [resolvable:$true] %s739
      %742 = dma.vmem_to_hbm [thread:$0]  %s740, 128, %s5, [#allocation4]
    $region29: #{tpu_custom_call.1} parent=1 // pred_fallthru
      _
    // Predicated region
    $region30: #{tpu_custom_call.1} parent=1 // pred_check
      _
    $region31: #{tpu_custom_call.1} parent=1 // pred_check_branch
      %744 = sbr.rel (0) target = $region33
    $region32: #{tpu_custom_call.1} parent=1 // pred_region
      %745 = dma.done [#allocation4], 128
    $region33: #{tpu_custom_call.1} parent=1 // pred_fallthru
      _
    %746 = vsyncpa [#allocation3], 1
    %747 = vsyncpa [#allocation4], 1

</llo_original>
